<compile_context>
chip_gen: v6e
topology: v6e:2x2x1
jax: 0.10.0
libtpu: 0.0.40
codegen_flags: <defaults>
</compile_context>

<pallas_src>
import jax
import jax.numpy as jnp
from jax.experimental import pallas as pl
from jax.experimental.pallas import tpu as pltpu

_LANE = 128


def _tensorcores_per_chip():
    """Best-effort TC count per chip: v7x has 2 TensorCores; v5e/v6e have 1.

    Defaults to 1 so we never add grid steps on chips that cannot use them.
    """
    try:
        kind = jax.devices()[0].device_kind.lower()
    except Exception:
        return 1
    return 2 if "v7" in kind else 1


def _mlp_kernel(x_ref, w1T_ref, b1_ref, w2T_ref, b2_ref, w3_ref, b3_ref, o_ref):
    """Whole MLP forward for one batch tile; activations kept lane-dense."""
    x = x_ref[...]                                   # [bt, sd] natural layout
    # Contract obs_dim against W1^T inside the kernel (MXU consumes the
    # transposed operand): [h1, sd] x [bt, sd] -> [h1, bt]; batch lands on
    # the lane axis without any wrapper/HBM transpose of states.
    z1 = jax.lax.dot_general(
        w1T_ref[...], x,
        dimension_numbers=(((1,), (1,)), ((), ())),
        preferred_element_type=jnp.float32)
    # TODO(synk): at very large tiles the single EUP (tanh) becomes the binder
    # on v6e/v7x; a bf16 tanh would relieve it, but v5e has no bf16 EUP/VPU,
    # so keep f32 here for portability/numerics.
    h1 = jnp.tanh(z1 + b1_ref[...])                  # [h1, bt]
    h2 = jnp.tanh(
        jnp.dot(w2T_ref[...], h1, preferred_element_type=jnp.float32)
        + b2_ref[...])                               # [h2, bt]
    # Final layer (h2 -> 1): VPU multiply + sublane reduce -> lane-dense [1, bt].
    v = jnp.sum(h2 * w3_ref[...], axis=0, keepdims=True) + b3_ref[0]
    o_ref[...] = v.astype(o_ref.dtype)


def v_net_forward(states, params, *, batch_tile=8192):
    """Pallas wrapper: natural-layout input, lane-dense output, resident weights.

    states: [B, obs_dim] float32
    params: (w1 [sd,h1], b1 [1,h1], w2 [h1,h2], b2 [1,h2], w3 [h2,1], b3 [1,1])
    returns: [B, 1] float32
    """
    w1, b1, w2, b2, w3, b3 = params
    B, sd = states.shape
    h1 = w1.shape[1]
    h2 = w2.shape[1]

    # --- Tile selection (batch tile is a multiple of 128 lanes) -------------
    bt = max(_LANE, min(int(batch_tile), pl.cdiv(B, _LANE) * _LANE))
    bt = (bt // _LANE) * _LANE
    ntc = _tensorcores_per_chip()
    # Only on multi-TC chips (v7x): keep >= 2 parallel grid steps so both
    # TensorCores get work; on 1-TC chips this would just add step overhead.
    if ntc > 1 and pl.cdiv(B, bt) == 1 and B > ntc * _LANE:
        bt = max(_LANE, pl.cdiv(B, ntc * _LANE) * _LANE)
    grid = (pl.cdiv(B, bt),)   # no padding: Pallas masks the partial edge block

    # --- One-time layout plumbing on the (tiny) parameters only -------------
    w1T = w1.T                                 # [h1, sd]
    w2T = w2.T                                 # [h2, h1]
    b1c = b1.reshape(h1, 1)                    # column biases (bcast over lanes)
    b2c = b2.reshape(h2, 1)
    w3c = w3.reshape(h2, 1)                    # last-layer weights as a column
    b3s = b3.reshape(1).astype(jnp.float32)    # scalar bias -> SMEM

    full = lambda shape: pl.BlockSpec(shape, lambda i: (0, 0))

    out = pl.pallas_call(
        _mlp_kernel,
        out_shape=jax.ShapeDtypeStruct((1, B), jnp.float32),
        grid_spec=pltpu.PrefetchScalarGridSpec(
            num_scalar_prefetch=0,
            grid=grid,
            in_specs=[
                pl.BlockSpec((bt, sd), lambda i: (i, 0)),   # states tile (natural layout)
                full((h1, sd)),                             # W1^T (VMEM-resident)
                full((h1, 1)),                              # b1
                full((h2, h1)),                             # W2^T
                full((h2, 1)),                              # b2
                full((h2, 1)),                              # w3 column
                pl.BlockSpec(memory_space=pltpu.MemorySpace.SMEM),  # b3 scalar
            ],
            out_specs=pl.BlockSpec((1, bt), lambda i: (0, i)),      # lane-dense output
        ),
        compiler_params=pltpu.CompilerParams(
            dimension_semantics=("parallel",),
        ),
    )(states, w1T, b1c, w2T, b2c, w3c, b3s)

    # (1, B) -> (B, 1): same row-major byte order, pure metadata reshape.
    return out.reshape(B, 1)


# ----------------------------- host-side helpers -----------------------------

def _orthogonal(key, shape, dtype=jnp.float32):
    """Deterministic orthogonal init (matches 'orthogonal' init in the module)."""
    a = jax.random.normal(key, shape, dtype)
    q, r = jnp.linalg.qr(a if shape[0] >= shape[1] else a.T)
    q = q * jnp.sign(jnp.diag(r))[None, :]
    return q if shape[0] >= shape[1] else q.T


def make_params(key, obs_dim, struct):
    """Layer sizes: [obs_dim, *struct, 1]."""
    sizes = [obs_dim] + list(struct) + [1]
    params = []
    for i in range(len(sizes) - 1):
        key, k = jax.random.split(key)
        w = _orthogonal(k, (sizes[i], sizes[i + 1]))
        b = jnp.zeros((1, sizes[i + 1]), jnp.float32)
        params.extend([w, b])
    return tuple(params)


def reference_forward(states, params):
    w1, b1, w2, b2, w3, b3 = params
    h = jnp.tanh(states @ w1 + b1)
    h = jnp.tanh(h @ w2 + b2)
    return h @ w3 + b3


if __name__ == "__main__":
    obs_dim = 16
    struct = [32, 32]

    key = jax.random.PRNGKey(0)
    kp, kx1, kx2 = jax.random.split(key, 3)
    params = make_params(kp, obs_dim, struct)

    # Case 1: small, non-multiple-of-128 batch (exercises masked edge block).
    B1 = 37
    states1 = jax.random.normal(kx1, (B1, obs_dim), jnp.float32)
    v1 = jax.block_until_ready(v_net_forward(states1, params))
    ref1 = reference_forward(states1, params)
    assert v1.shape == (B1, 1)
    assert jnp.allclose(v1, ref1, atol=1e-4, rtol=1e-4)

    # Case 2: larger batch, still a single tile on 1-TC chips, 2 tiles on v7x.
    B2 = 300
    states2 = jax.random.normal(kx2, (B2, obs_dim), jnp.float32)
    v2 = jax.block_until_ready(v_net_forward(states2, params))
    ref2 = reference_forward(states2, params)
    assert v2.shape == (B2, 1)
    assert jnp.allclose(v2, ref2, atol=1e-4, rtol=1e-4)

    print("KERNEL_OK")
</pallas_src>

<mosaic_0001>
module attributes {stable_mosaic.version = 11 : i64} {
  func.func @_mlp_kernel(%arg0: i32, %arg1: memref<128x16xf32, #tpu.memory_space<vmem>>, %arg2: memref<32x16xf32, #tpu.memory_space<vmem>>, %arg3: memref<32x1xf32, #tpu.memory_space<vmem>>, %arg4: memref<32x32xf32, #tpu.memory_space<vmem>>, %arg5: memref<32x1xf32, #tpu.memory_space<vmem>>, %arg6: memref<32x1xf32, #tpu.memory_space<vmem>>, %arg7: memref<1xf32, #tpu.memory_space<smem>>, %arg8: memref<1x128xf32, #tpu.memory_space<vmem>>) attributes {dimension_semantics = [#tpu.dimension_semantics<parallel>], iteration_bounds = array<i64: 1>, scalar_prefetch = 0 : i64, scratch_operands = 0 : i64, tpu.core_type = #tpu.core_type<tc>, window_params = [{transform_indices = @transform_0, window_bounds = array<i64: 128, 16>}, {pipeline_mode = #tpu.pipeline_mode<synchronous>, transform_indices = @transform_1, window_bounds = array<i64: 32, 16>}, {pipeline_mode = #tpu.pipeline_mode<synchronous>, transform_indices = @transform_2, window_bounds = array<i64: 32, 1>}, {pipeline_mode = #tpu.pipeline_mode<synchronous>, transform_indices = @transform_3, window_bounds = array<i64: 32, 32>}, {pipeline_mode = #tpu.pipeline_mode<synchronous>, transform_indices = @transform_4, window_bounds = array<i64: 32, 1>}, {pipeline_mode = #tpu.pipeline_mode<synchronous>, transform_indices = @transform_5, window_bounds = array<i64: 32, 1>}, {transform_indices = @transform_6, window_bounds = array<i64: 1>}, {transform_indices = @transform_7, window_bounds = array<i64: 1, 128>}]} {
    %c0 = arith.constant 0 : index
    %c0_0 = arith.constant 0 : index
    %0 = vector.load %arg1[%c0, %c0_0] : memref<128x16xf32, #tpu.memory_space<vmem>>, vector<128x16xf32>
    %c0_1 = arith.constant 0 : index
    %c0_2 = arith.constant 0 : index
    %1 = vector.load %arg2[%c0_1, %c0_2] : memref<32x16xf32, #tpu.memory_space<vmem>>, vector<32x16xf32>
    %cst = arith.constant dense<0.000000e+00> : vector<32x128xf32>
    %2 = tpu.matmul %1, %0, %cst {dimension_numbers = #tpu.dot_dimension_numbers<[1], [1], [0], [0], [0, 0, 1, 0], [], []>} : vector<32x16xf32>, vector<128x16xf32>, vector<32x128xf32> -> vector<32x128xf32>
    %c0_3 = arith.constant 0 : index
    %c0_4 = arith.constant 0 : index
    %3 = vector.load %arg3[%c0_3, %c0_4] : memref<32x1xf32, #tpu.memory_space<vmem>>, vector<32x1xf32>
    %4 = vector.broadcast %3 : vector<32x1xf32> to vector<32x128xf32>
    %5 = arith.addf %2, %4 : vector<32x128xf32>
    %6 = math.tanh %5 : vector<32x128xf32>
    %c0_5 = arith.constant 0 : index
    %c0_6 = arith.constant 0 : index
    %7 = vector.load %arg4[%c0_5, %c0_6] : memref<32x32xf32, #tpu.memory_space<vmem>>, vector<32x32xf32>
    %cst_7 = arith.constant dense<0.000000e+00> : vector<32x128xf32>
    %8 = tpu.matmul %7, %6, %cst_7 {dimension_numbers = #tpu.dot_dimension_numbers<[1], [0], [0], [1], [0, 0, 1, 1], [], []>} : vector<32x32xf32>, vector<32x128xf32>, vector<32x128xf32> -> vector<32x128xf32>
    %c0_8 = arith.constant 0 : index
    %c0_9 = arith.constant 0 : index
    %9 = vector.load %arg5[%c0_8, %c0_9] : memref<32x1xf32, #tpu.memory_space<vmem>>, vector<32x1xf32>
    %10 = vector.broadcast %9 : vector<32x1xf32> to vector<32x128xf32>
    %11 = arith.addf %8, %10 : vector<32x128xf32>
    %12 = math.tanh %11 : vector<32x128xf32>
    %c0_10 = arith.constant 0 : index
    %c0_11 = arith.constant 0 : index
    %13 = vector.load %arg6[%c0_10, %c0_11] : memref<32x1xf32, #tpu.memory_space<vmem>>, vector<32x1xf32>
    %14 = vector.broadcast %13 : vector<32x1xf32> to vector<32x128xf32>
    %15 = arith.mulf %12, %14 : vector<32x128xf32>
    %cst_12 = arith.constant dense<0.000000e+00> : vector<128xf32>
    %16 = vector.multi_reduction <add>, %15, %cst_12 [0] : vector<32x128xf32> to vector<128xf32>
    %17 = vector.shape_cast %16 : vector<128xf32> to vector<1x128xf32>
    %c0_13 = arith.constant 0 : index
    %18 = memref.load %arg7[%c0_13] : memref<1xf32, #tpu.memory_space<smem>>
    %19 = vector.broadcast %18 : f32 to vector<1x128xf32>
    %20 = arith.addf %17, %19 : vector<1x128xf32>
    %c0_14 = arith.constant 0 : index
    %c0_15 = arith.constant 0 : index
    %21 = vector.load %arg8[%c0_14, %c0_15] : memref<1x128xf32, #tpu.memory_space<vmem>>, vector<1x128xf32>
    tpu.vector_store %arg8[%c0_14, %c0_15], %20 {strides = array<i32>} : memref<1x128xf32, #tpu.memory_space<vmem>>, vector<1x128xf32>,
    return
  }
  func.func @transform_0(%arg0: i32) -> (i32, i32) {
    %c0_i32 = arith.constant 0 : i32
    %c0_i32_0 = arith.constant 0 : i32
    return %arg0, %c0_i32 : i32, i32
  }
  func.func @transform_1(%arg0: i32) -> (i32, i32) {
    %c0_i32 = arith.constant 0 : i32
    %c0_i32_0 = arith.constant 0 : i32
    %c0_i32_1 = arith.constant 0 : i32
    return %c0_i32, %c0_i32_0 : i32, i32
  }
  func.func @transform_2(%arg0: i32) -> (i32, i32) {
    %c0_i32 = arith.constant 0 : i32
    %c0_i32_0 = arith.constant 0 : i32
    %c0_i32_1 = arith.constant 0 : i32
    return %c0_i32, %c0_i32_0 : i32, i32
  }
  func.func @transform_3(%arg0: i32) -> (i32, i32) {
    %c0_i32 = arith.constant 0 : i32
    %c0_i32_0 = arith.constant 0 : i32
    %c0_i32_1 = arith.constant 0 : i32
    return %c0_i32, %c0_i32_0 : i32, i32
  }
  func.func @transform_4(%arg0: i32) -> (i32, i32) {
    %c0_i32 = arith.constant 0 : i32
    %c0_i32_0 = arith.constant 0 : i32
    %c0_i32_1 = arith.constant 0 : i32
    return %c0_i32, %c0_i32_0 : i32, i32
  }
  func.func @transform_5(%arg0: i32) -> (i32, i32) {
    %c0_i32 = arith.constant 0 : i32
    %c0_i32_0 = arith.constant 0 : i32
    %c0_i32_1 = arith.constant 0 : i32
    return %c0_i32, %c0_i32_0 : i32, i32
  }
  func.func @transform_6(%arg0: i32) -> i32 {
    %c0_i32 = arith.constant 0 : i32
    %c0_i32_0 = arith.constant 0 : i32
    return %c0_i32 : i32
  }
  func.func @transform_7(%arg0: i32) -> (i32, i32) {
    %c0_i32 = arith.constant 0 : i32
    %c0_i32_0 = arith.constant 0 : i32
    return %c0_i32, %arg0 : i32, i32
  }
}

</mosaic_0001>

<llo_original>
// kernel: tpu_custom_call.1
$region0: #{tpu_custom_call.1}
  #allocation0 [shape = 'u32[]', space=smem, size = 0x4, offset = 0x4, fixed_abs, tag = 'smem constant byte address 0x4 - core index']
  #allocation1 [shape = 'u32[144,128]{1,0:T(1,128)}', space=vmem, size = 0x12000, scoped, tag = 'internal scratch']
  #allocation2 [shape = 'f32[1]{0:T(128)S(6)}', space=smem, size = 0x200, scoped, tag = 'scoped memory for tpu_custom_call.1']
  %s0 = inlined_call_operand.vmem [shape: f32[37,16], index: 0, kind: input, shape index: {}]
  %s1 = inlined_call_operand.vmem [shape: f32[32,16], index: 1, kind: input, shape index: {}]
  %s2 = inlined_call_operand.vmem [shape: f32[32,1], index: 2, kind: input, shape index: {}]
  %s3 = inlined_call_operand.vmem [shape: f32[32,32], index: 3, kind: input, shape index: {}]
  %s4 = inlined_call_operand.vmem [shape: f32[32,1], index: 4, kind: input, shape index: {}]
  %s5 = inlined_call_operand.vmem [shape: f32[32,1], index: 5, kind: input, shape index: {}]
  %s6 = inlined_call_operand.<no memory space> [shape: f32[1], index: 6, kind: input, shape index: {}]
  %s7 = inlined_call_operand.hbm [shape: f32[1,37], index: 7, kind: output, shape index: {}]
  %s8 = sld [smem:[#allocation0]]
  $region38: #{tpu_custom_call.1} parent=0
    _
  %s10 = ssub.s32 1, %s8
  %s11 = scalar_select 0, %s10, %s8
  %12 = sst [smem:[#allocation2]] %s6
  $region1: #{tpu_custom_call.1} parent=0
    #allocation3 [shape = 'u8[512]{0}', space=vmem, size = 0x400, scoped, tag = 'output window, operand 0, single buffered']
    #allocation4 [shape = 's32[1]{0}', space=sflag, size = 0x4, scoped, tag = 'scoped memory for tpu_custom_call.1']
    %13 = vsyncpa [#allocation4], 0
    // Predicated region
    $region2: #{tpu_custom_call.1} parent=1 // pred_check
      _
    $region3: #{tpu_custom_call.1} parent=1 // pred_check_branch
      %15 = sbr.rel (0) target = $region5
    $region4: #{tpu_custom_call.1} parent=1 // pred_region
      _
    $region5: #{tpu_custom_call.1} parent=1 // pred_fallthru
      _
    // Predicated region
    $region6: #{tpu_custom_call.1} parent=1 // pred_check
      _
    $region7: #{tpu_custom_call.1} parent=1 // pred_check_branch
      %17 = sbr.rel (0) target = $region9
    $region8: #{tpu_custom_call.1} parent=1 // pred_region
      _
    $region9: #{tpu_custom_call.1} parent=1 // pred_fallthru
      _
    // Predicated region
    $region10: #{tpu_custom_call.1} parent=1 // pred_check
      _
    $region11: #{tpu_custom_call.1} parent=1 // pred_check_branch
      %19 = sbr.rel (0) target = $region13
    $region12: #{tpu_custom_call.1} parent=1 // pred_region
      _
    $region13: #{tpu_custom_call.1} parent=1 // pred_fallthru
      _
    // Predicated region
    $region14: #{tpu_custom_call.1} parent=1 // pred_check
      _
    $region15: #{tpu_custom_call.1} parent=1 // pred_check_branch
      %21 = sbr.rel (0) target = $region17
    $region16: #{tpu_custom_call.1} parent=1 // pred_region
      _
    $region17: #{tpu_custom_call.1} parent=1 // pred_fallthru
      _
    // Predicated region
    $region18: #{tpu_custom_call.1} parent=1 // pred_check
      _
    $region19: #{tpu_custom_call.1} parent=1 // pred_check_branch
      %23 = sbr.rel (0) target = $region21
    $region20: #{tpu_custom_call.1} parent=1 // pred_region
      _
    $region21: #{tpu_custom_call.1} parent=1 // pred_fallthru
      _
    // Predicated region
    $region22: #{tpu_custom_call.1} parent=1 // pred_check
      _
    $region23: #{tpu_custom_call.1} parent=1 // pred_check_branch
      %25 = sbr.rel (0) target = $region25
    $region24: #{tpu_custom_call.1} parent=1 // pred_region
      _
    $region25: #{tpu_custom_call.1} parent=1 // pred_fallthru
      _
    // Predicated region
    $region26: #{tpu_custom_call.1} parent=1 // pred_check
      _
    $region27: #{tpu_custom_call.1} parent=1 // pred_check_branch
      %27 = sbr.rel (0) target = $region29
    $region28: #{tpu_custom_call.1} parent=1 // pred_region
      _
    $region29: #{tpu_custom_call.1} parent=1 // pred_fallthru
      _
    %v28 = vld [vmem:[%s0] sm:$0xff]
    %v29 = vld [vmem:[%s0 + $0x8] sm:$0xff]
    %v30 = vld [vmem:[%s0 + $0x10] sm:$0xff]
    %v31 = vld [vmem:[%s0 + $0x18] sm:$0xff]
    %v32 = vld [vmem:[%s0 + $0x20] sm:$0xff]
    %v33 = vld [vmem:[%s0 + $0x28] sm:$0xff]
    %v34 = vld [vmem:[%s0 + $0x30] sm:$0xff]
    %v35 = vld [vmem:[%s0 + $0x38] sm:$0xff]
    %v36 = vld [vmem:[%s0 + $0x40] sm:$0xff]
    %v37 = vld [vmem:[%s0 + $0x48] sm:$0xff]
    %v38 = vld [vmem:[%s0 + $0x50] sm:$0xff]
    %v39 = vld [vmem:[%s0 + $0x58] sm:$0xff]
    %v40 = vld [vmem:[%s0 + $0x60] sm:$0xff]
    %v41 = vld [vmem:[%s0 + $0x68] sm:$0xff]
    %v42 = vld [vmem:[%s0 + $0x70] sm:$0xff]
    %v43 = vld [vmem:[%s0 + $0x78] sm:$0xff]
    %v44 = vld [vmem:[%s1] sm:$0xff]
    %v45 = vld [vmem:[%s1 + $0x8] sm:$0xff]
    %v46 = vld [vmem:[%s1 + $0x10] sm:$0xff]
    %v47 = vld [vmem:[%s1 + $0x18] sm:$0xff]
    %v48 = vld [vmem:[%s2] sm:$0xff]
    %v49 = vld [vmem:[%s2 + $0x8] sm:$0xff]
    %v50 = vld [vmem:[%s2 + $0x10] sm:$0xff]
    %v51 = vld [vmem:[%s2 + $0x18] sm:$0xff]
    %53 = vset.pattern.permute.xlu0 0
    %54 = vperm.xlu0 %53, %v48
    %v55 = vpop.permute.xlu0 %54
    %58 = vset.pattern.permute.xlu0 0
    %59 = vperm.xlu0 %58, %v49
    %v60 = vpop.permute.xlu0 %59
    %63 = vset.pattern.permute.xlu0 0
    %64 = vperm.xlu0 %63, %v50
    %v65 = vpop.permute.xlu0 %64
    %68 = vset.pattern.permute.xlu0 0
    %69 = vperm.xlu0 %68, %v51
    %v70 = vpop.permute.xlu0 %69
    %vm72 = vcmask 130048
    %v74 = vsel %vm72, %v44, 0
    %v77 = vsel %vm72, %v45, 0
    %v80 = vsel %vm72, %v46, 0
    %v83 = vsel %vm72, %v47, 0
    %v86 = vsel %vm72, %v28, 0
    %v89 = vsel %vm72, %v29, 0
    %v92 = vsel %vm72, %v30, 0
    %v95 = vsel %vm72, %v31, 0
    %v98 = vsel %vm72, %v32, 0
    %v101 = vsel %vm72, %v33, 0
    %v104 = vsel %vm72, %v34, 0
    %v107 = vsel %vm72, %v35, 0
    %v110 = vsel %vm72, %v36, 0
    %v113 = vsel %vm72, %v37, 0
    %v116 = vsel %vm72, %v38, 0
    %v119 = vsel %vm72, %v39, 0
    %v122 = vsel %vm72, %v40, 0
    %v125 = vsel %vm72, %v41, 0
    %v128 = vsel %vm72, %v42, 0
    %v131 = vsel %vm72, %v43, 0
    %133 = vmatprep.subr.mxu0 0.0
    %134 = vmatpush1.xpose.msra.mxu0 %v131
    %135 = vmatprep.subr.mxu0 0.0
    %136 = vmatpush1.xpose.msra.mxu0 %v128
    %137 = vmatprep.subr.mxu0 0.0
    %138 = vmatpush1.xpose.msra.mxu0 %v125
    %139 = vmatprep.subr.mxu0 0.0
    %140 = vmatpush1.xpose.msra.mxu0 %v122
    %141 = vmatprep.subr.mxu0 0.0
    %142 = vmatpush1.xpose.msra.mxu0 %v119
    %143 = vmatprep.subr.mxu0 0.0
    %144 = vmatpush1.xpose.msra.mxu0 %v116
    %145 = vmatprep.subr.mxu0 0.0
    %146 = vmatpush1.xpose.msra.mxu0 %v113
    %147 = vmatprep.subr.mxu0 0.0
    %148 = vmatpush1.xpose.msra.mxu0 %v110
    %149 = vmatprep.subr.mxu0 0.0
    %150 = vmatpush1.xpose.msra.mxu0 %v107
    %151 = vmatprep.subr.mxu0 0.0
    %152 = vmatpush1.xpose.msra.mxu0 %v104
    %153 = vmatprep.subr.mxu0 0.0
    %154 = vmatpush1.xpose.msra.mxu0 %v101
    %155 = vmatprep.subr.mxu0 0.0
    %156 = vmatpush1.xpose.msra.mxu0 %v98
    %157 = vmatprep.subr.mxu0 0.0
    %158 = vmatpush1.xpose.msra.mxu0 %v95
    %159 = vmatprep.subr.mxu0 0.0
    %160 = vmatpush1.xpose.msra.mxu0 %v92
    %161 = vmatprep.subr.mxu0 0.0
    %162 = vmatpush1.xpose.msra.mxu0 %v89
    %163 = vmatprep.subr.mxu0 0.0
    %164 = vmatpush1.xpose.msra.mxu0 %v86
    %165 = vmatprep.subr.mxu0 0.0
    %166 = vmatpush2.xpose.msra.mxu0 0.0
    %167 = vmatprep.subr.mxu0 0.0
    %168 = vmatpush2.xpose.msra.mxu0 0.0
    %169 = vmatprep.subr.mxu0 0.0
    %170 = vmatpush2.xpose.msra.mxu0 0.0
    %171 = vmatprep.subr.mxu0 0.0
    %172 = vmatpush2.xpose.msra.mxu0 0.0
    %173 = vmatprep.subr.mxu0 0.0
    %174 = vmatpush2.xpose.msra.mxu0 0.0
    %175 = vmatprep.subr.mxu0 0.0
    %176 = vmatpush2.xpose.msra.mxu0 0.0
    %177 = vmatprep.subr.mxu0 0.0
    %178 = vmatpush2.xpose.msra.mxu0 0.0
    %179 = vmatprep.subr.mxu0 0.0
    %180 = vmatpush2.xpose.msra.mxu0 0.0
    %181 = vmatprep.subr.mxu0 0.0
    %182 = vmatpush2.xpose.msra.mxu0 0.0
    %183 = vmatprep.subr.mxu0 0.0
    %184 = vmatpush2.xpose.msra.mxu0 0.0
    %185 = vmatprep.subr.mxu0 0.0
    %186 = vmatpush2.xpose.msra.mxu0 0.0
    %187 = vmatprep.subr.mxu0 0.0
    %188 = vmatpush2.xpose.msra.mxu0 0.0
    %189 = vmatprep.subr.mxu0 0.0
    %190 = vmatpush2.xpose.msra.mxu0 0.0
    %191 = vmatprep.subr.mxu0 0.0
    %192 = vmatpush2.xpose.msra.mxu0 0.0
    %193 = vmatprep.subr.mxu0 0.0
    %194 = vmatpush2.xpose.msra.mxu0 0.0
    %195 = vmatprep.subr.mxu0 0.0
    %196 = vmatpush2.xpose.msra.mxu0 0.0
    %197 = vmatprep.mubr.f32.mxu0 0.0
    %198 = vmatmul.mubr.f32.gmra.mxu0 %v74
    %v199 = vpop.f32.mrf.mxu0
    %v200 = vadd.f32 %v55, %v199
    %v201 = vpop.f32.mrf.mxu0
    %202 = vmatprep.mubr.f32.mxu0 0.0
    %203 = vmatmul.mubr.f32.gmra.mxu0 %v77
    %v204 = vpop.f32.mrf.mxu0
    %v205 = vadd.f32 %v60, %v204
    %v206 = vpop.f32.mrf.mxu0
    %207 = vmatprep.mubr.f32.mxu0 0.0
    %208 = vmatmul.mubr.f32.gmra.mxu0 %v80
    %v209 = vpop.f32.mrf.mxu0
    %v210 = vadd.f32 %v65, %v209
    %v211 = vpop.f32.mrf.mxu0
    %212 = vmatprep.mubr.f32.mxu0 0.0
    %213 = vmatmul.mubr.f32.gmra.mxu0 %v83
    %v214 = vpop.f32.mrf.mxu0
    %v215 = vadd.f32 %v70, %v214
    %v216 = vpop.f32.mrf.mxu0
    %217 = vdwg.mxu0
    %v218 = vtanh.pop %v200
    %v219 = vtanh.pop %v205
    %v220 = vtanh.pop %v210
    %v221 = vtanh.pop %v215
    %v222 = vld [vmem:[%s3] sm:$0xff]
    %v223 = vld [vmem:[%s3 + $0x8] sm:$0xff]
    %v224 = vld [vmem:[%s3 + $0x10] sm:$0xff]
    %v225 = vld [vmem:[%s3 + $0x18] sm:$0xff]
    %v226 = vld [vmem:[%s4] sm:$0xff]
    %v227 = vld [vmem:[%s4 + $0x8] sm:$0xff]
    %v228 = vld [vmem:[%s4 + $0x10] sm:$0xff]
    %v229 = vld [vmem:[%s4 + $0x18] sm:$0xff]
    %231 = vset.pattern.permute.xlu0 0
    %232 = vperm.xlu0 %231, %v226
    %v233 = vpop.permute.xlu0 %232
    %236 = vset.pattern.permute.xlu0 0
    %237 = vperm.xlu0 %236, %v227
    %v238 = vpop.permute.xlu0 %237
    %241 = vset.pattern.permute.xlu0 0
    %242 = vperm.xlu0 %241, %v228
    %v243 = vpop.permute.xlu0 %242
    %246 = vset.pattern.permute.xlu0 0
    %247 = vperm.xlu0 %246, %v229
    %v248 = vpop.permute.xlu0 %247
    %vm250 = vcmask 261120
    %v252 = vsel %vm250, %v222, 0
    %v255 = vsel %vm250, %v223, 0
    %v258 = vsel %vm250, %v224, 0
    %v261 = vsel %vm250, %v225, 0
    %263 = vmatprep.subr.mxu0 0.0
    %264 = vmatpush1.msra.mxu0 0.0
    %265 = vmatprep.subr.mxu0 0.0
    %266 = vmatpush1.msra.mxu0 0.0
    %267 = vmatprep.subr.mxu0 0.0
    %268 = vmatpush1.msra.mxu0 0.0
    %269 = vmatprep.subr.mxu0 0.0
    %270 = vmatpush1.msra.mxu0 0.0
    %271 = vmatprep.subr.mxu0 0.0
    %272 = vmatpush1.msra.mxu0 0.0
    %273 = vmatprep.subr.mxu0 0.0
    %274 = vmatpush1.msra.mxu0 0.0
    %275 = vmatprep.subr.mxu0 0.0
    %276 = vmatpush1.msra.mxu0 0.0
    %277 = vmatprep.subr.mxu0 0.0
    %278 = vmatpush1.msra.mxu0 0.0
    %279 = vmatprep.subr.mxu0 0.0
    %280 = vmatpush1.msra.mxu0 0.0
    %281 = vmatprep.subr.mxu0 0.0
    %282 = vmatpush1.msra.mxu0 0.0
    %283 = vmatprep.subr.mxu0 0.0
    %284 = vmatpush1.msra.mxu0 0.0
    %285 = vmatprep.subr.mxu0 0.0
    %286 = vmatpush1.msra.mxu0 0.0
    %287 = vmatprep.subr.mxu0 0.0
    %288 = vmatpush1.msra.mxu0 %v221
    %289 = vmatprep.subr.mxu0 0.0
    %290 = vmatpush1.msra.mxu0 %v220
    %291 = vmatprep.subr.mxu0 0.0
    %292 = vmatpush1.msra.mxu0 %v219
    %293 = vmatprep.subr.mxu0 0.0
    %294 = vmatpush1.msra.mxu0 %v218
    %295 = vmatprep.subr.mxu0 0.0
    %296 = vmatpush2.msra.mxu0 0.0
    %297 = vmatprep.subr.mxu0 0.0
    %298 = vmatpush2.msra.mxu0 0.0
    %299 = vmatprep.subr.mxu0 0.0
    %300 = vmatpush2.msra.mxu0 0.0
    %301 = vmatprep.subr.mxu0 0.0
    %302 = vmatpush2.msra.mxu0 0.0
    %303 = vmatprep.subr.mxu0 0.0
    %304 = vmatpush2.msra.mxu0 0.0
    %305 = vmatprep.subr.mxu0 0.0
    %306 = vmatpush2.msra.mxu0 0.0
    %307 = vmatprep.subr.mxu0 0.0
    %308 = vmatpush2.msra.mxu0 0.0
    %309 = vmatprep.subr.mxu0 0.0
    %310 = vmatpush2.msra.mxu0 0.0
    %311 = vmatprep.subr.mxu0 0.0
    %312 = vmatpush2.msra.mxu0 0.0
    %313 = vmatprep.subr.mxu0 0.0
    %314 = vmatpush2.msra.mxu0 0.0
    %315 = vmatprep.subr.mxu0 0.0
    %316 = vmatpush2.msra.mxu0 0.0
    %317 = vmatprep.subr.mxu0 0.0
    %318 = vmatpush2.msra.mxu0 0.0
    %319 = vmatprep.subr.mxu0 0.0
    %320 = vmatpush2.msra.mxu0 0.0
    %321 = vmatprep.subr.mxu0 0.0
    %322 = vmatpush2.msra.mxu0 0.0
    %323 = vmatprep.subr.mxu0 0.0
    %324 = vmatpush2.msra.mxu0 0.0
    %325 = vmatprep.subr.mxu0 0.0
    %326 = vmatpush2.msra.mxu0 0.0
    %327 = vmatprep.mubr.f32.mxu0 0.0
    %328 = vmatmul.mubr.f32.gmra.mxu0 %v252
    %v329 = vpop.f32.mrf.mxu0
    %v330 = vadd.f32 %v233, %v329
    %v331 = vpop.f32.mrf.mxu0
    %332 = vmatprep.mubr.f32.mxu0 0.0
    %333 = vmatmul.mubr.f32.gmra.mxu0 %v255
    %v334 = vpop.f32.mrf.mxu0
    %v335 = vadd.f32 %v238, %v334
    %v336 = vpop.f32.mrf.mxu0
    %337 = vmatprep.mubr.f32.mxu0 0.0
    %338 = vmatmul.mubr.f32.gmra.mxu0 %v258
    %v339 = vpop.f32.mrf.mxu0
    %v340 = vadd.f32 %v243, %v339
    %v341 = vpop.f32.mrf.mxu0
    %342 = vmatprep.mubr.f32.mxu0 0.0
    %343 = vmatmul.mubr.f32.gmra.mxu0 %v261
    %v344 = vpop.f32.mrf.mxu0
    %v345 = vadd.f32 %v248, %v344
    %v346 = vpop.f32.mrf.mxu0
    %347 = vdwg.mxu0
    %v348 = vtanh.pop %v330
    %v349 = vtanh.pop %v335
    %v350 = vtanh.pop %v340
    %v351 = vtanh.pop %v345
    %v352 = vld [vmem:[%s5] sm:$0xff]
    %v353 = vld [vmem:[%s5 + $0x8] sm:$0xff]
    %v354 = vld [vmem:[%s5 + $0x10] sm:$0xff]
    %v355 = vld [vmem:[%s5 + $0x18] sm:$0xff]
    %357 = vset.pattern.permute.xlu0 0
    %358 = vperm.xlu0 %357, %v352
    %v359 = vpop.permute.xlu0 %358
    %362 = vset.pattern.permute.xlu0 0
    %363 = vperm.xlu0 %362, %v353
    %v364 = vpop.permute.xlu0 %363
    %367 = vset.pattern.permute.xlu0 0
    %368 = vperm.xlu0 %367, %v354
    %v369 = vpop.permute.xlu0 %368
    %372 = vset.pattern.permute.xlu0 0
    %373 = vperm.xlu0 %372, %v355
    %v374 = vpop.permute.xlu0 %373
    %v376 = vmul.f32 %v348, %v359
    %v377 = vmul.f32 %v349, %v364
    %v378 = vmul.f32 %v350, %v369
    %v379 = vmul.f32 %v351, %v374
    %v380 = vadd.f32 %v376, %v377
    %v381 = vadd.f32 %v380, %v378
    %v382 = vadd.f32 %v381, %v379
    %v383 = vrot.slane %v382, 4
    %v384 = vadd.f32 %v382, %v383
    %v385 = vrot.slane %v384, 2
    %v386 = vadd.f32 %v384, %v385
    %v387 = vrot.slane %v386, 1
    %v388 = vadd.f32 %v386, %v387
    %s389 = sld [smem:[#allocation2]]
    %v390 = vstv %s389
    %v391 = vadd.f32 %v388, %v390
    %392 = vst [vmem:[#allocation3] sm:$0x1] %v391
    // Predicated region
    $region30: #{tpu_custom_call.1} parent=1 // pred_check
      _
    $region31: #{tpu_custom_call.1} parent=1 // pred_check_branch
      %394 = sbr.rel (0) target = $region33
    $region32: #{tpu_custom_call.1} parent=1 // pred_region
      %s396 = ssub.s32 16, 16
      %397 = vsyncadd [#allocation4], %s396
      %s399 = sshll.u32 [#allocation3], 4
      %s400 = int_to_ptr.vmem [resolvable:$true] %s399
      %402 = dma.vmem_to_hbm [thread:$0]  %s400, 16, %s7, [#allocation4]
    $region33: #{tpu_custom_call.1} parent=1 // pred_fallthru
      _
    // Predicated region
    $region34: #{tpu_custom_call.1} parent=1 // pred_check
      _
    $region35: #{tpu_custom_call.1} parent=1 // pred_check_branch
      %404 = sbr.rel (0) target = $region37
    $region36: #{tpu_custom_call.1} parent=1 // pred_region
      %405 = dma.done [#allocation4], 16
    $region37: #{tpu_custom_call.1} parent=1 // pred_fallthru
      _
    %406 = vsyncpa [#allocation4], 1

</llo_original>
